<compile_context>
chip_gen: v5e
topology: v5e:2x2
jax: 0.10.0
libtpu: 0.0.40
codegen_flags: <defaults>
</compile_context>

<pallas_src>
import jax
import jax.numpy as jnp
from jax.experimental import pallas as pl
from jax.experimental.pallas import tpu as pltpu


OUT_DIM = 3072  # 3 * 32 * 32


def _round_up(x, m):
    return ((x + m - 1) // m) * m


def decoder_kernel(z_ref, w1_ref, b1_ref, w2_ref, b2_ref, w3_ref, b3_ref,
                   out_ref):
    """One batch-tile step of the whole decoder MLP.

    z_ref : (TM, z_dim)   f32
    w*_ref: bf16 weights (in_dim, out_dim);  b*_ref: f32 biases (1, out_dim)
    out_ref: (TM, 3072)   f32 or bf16
    """
    zb = z_ref[...].astype(jnp.bfloat16)
    h1 = jnp.dot(zb, w1_ref[...], preferred_element_type=jnp.float32)
    h1 = jnp.maximum(h1 + b1_ref[...], 0.0)

    h2 = jnp.dot(h1.astype(jnp.bfloat16), w2_ref[...],
                 preferred_element_type=jnp.float32)
    h2 = jnp.maximum(h2 + b2_ref[...], 0.0)

    logits = jnp.dot(h2.astype(jnp.bfloat16), w3_ref[...],
                     preferred_element_type=jnp.float32)
    logits = logits + b3_ref[...]

    # sigmoid(x) = 1 / (1 + exp(-x)); exp and reciprocal both issue on the EUP
    # slot, keeping the VPU free for bias-add / ReLU work.
    t = jnp.exp(-logits)
    out_ref[...] = pl.reciprocal(1.0 + t, approx=True).astype(out_ref.dtype)


def decoder_cifar10_forward(z, params, out_dtype=jnp.float32):
    """z: (B, z_dim) float32 -> (B, 3, 32, 32) in out_dtype."""
    w1, b1, w2, b2, w3, b3 = params
    B, z_dim = z.shape
    hidden_2 = w1.shape[1]
    hidden_1 = w2.shape[1]
    out_dim = w3.shape[1]
    assert out_dim == OUT_DIM and out_dim % 128 == 0

    # --- generation-aware VMEM budget --------------------------------------
    vmem_cap = 64 << 20  # conservative fallback (v7x-sized)
    try:
        vmem_cap = int(pltpu.get_tpu_info().vmem_capacity_bytes)
    except Exception:
        pass

    # --- batch tiling -------------------------------------------------------
    # Multiple of 16 (bf16 sublane packing).  Cap: 1024 rows on 128 MiB VMEM
    # parts (v5e/v6e), 512 rows on 64 MiB parts (v7x) so the double-buffered
    # full-N f32 output + f32 intermediates fit comfortably.
    tm_cap = 1024 if vmem_cap >= (96 << 20) else 512
    TM = min(tm_cap, _round_up(B, 16))
    # Keep >= 2 batch tiles when the batch is big enough to split (v7x megacore).
    if B > 16 and _round_up(B, TM) // TM < 2:
        TM = _round_up((B + 1) // 2, 16)
    B_pad = _round_up(B, TM)
    grid = (B_pad // TM,)

    # --- operands ------------------------------------------------------------
    if B_pad != B:
        z = jnp.pad(z, ((0, B_pad - B), (0, 0)))
    z = z.astype(jnp.float32)

    bf16 = jnp.bfloat16
    w1b, w2b, w3b = w1.astype(bf16), w2.astype(bf16), w3.astype(bf16)
    b1f = b1.astype(jnp.float32).reshape(1, hidden_2)
    b2f = b2.astype(jnp.float32).reshape(1, hidden_1)
    b3f = b3.astype(jnp.float32).reshape(1, out_dim)

    const = lambda shape: pl.BlockSpec(shape, lambda i: (0, 0))

    out_itemsize = jnp.dtype(out_dtype).itemsize
    weight_bytes = ((w1b.size + w2b.size + w3b.size) * 2
                    + (b1f.size + b2f.size + b3f.size) * 4)
    # Double-buffered z/out tiles, default-double-buffered resident weights,
    # plus headroom for the in-kernel f32 (TM, out_dim) intermediates.
    vmem_needed = (2 * (TM * z_dim * 4 + TM * out_dim * out_itemsize)
                   + 2 * weight_bytes
                   + 2 * TM * out_dim * 4
                   + (2 << 20))
    vmem_limit = int(min(max(vmem_needed, 32 << 20), vmem_cap * 3 // 4))

    cost = pl.CostEstimate(
        flops=2 * B_pad * (z_dim * hidden_2 + hidden_2 * hidden_1
                           + hidden_1 * out_dim),
        transcendentals=2 * B_pad * out_dim,          # exp + reciprocal
        bytes_accessed=(z.size * 4                    # z read once
                        + weight_bytes                # weights resident: one fetch
                        + B_pad * out_dim * out_itemsize),
    )

    y = pl.pallas_call(
        decoder_kernel,
        out_shape=jax.ShapeDtypeStruct((B_pad, out_dim), out_dtype),
        grid_spec=pltpu.PrefetchScalarGridSpec(
            num_scalar_prefetch=0,
            grid=grid,
            in_specs=[
                pl.BlockSpec((TM, z_dim), lambda i: (i, 0)),   # z batch tile
                const((z_dim, hidden_2)),                      # w1 (resident)
                const((1, hidden_2)),                          # b1
                const((hidden_2, hidden_1)),                   # w2 (resident)
                const((1, hidden_1)),                          # b2
                const((hidden_1, out_dim)),                    # w3 (resident)
                const((1, out_dim)),                           # b3
            ],
            out_specs=pl.BlockSpec((TM, out_dim), lambda i: (i, 0)),
        ),
        compiler_params=pltpu.CompilerParams(
            dimension_semantics=("parallel",),
            vmem_limit_bytes=vmem_limit,
        ),
        cost_estimate=cost,
    )(z, w1b, b1f, w2b, b2f, w3b, b3f)

    # Drop batch padding; PyTorch's y.view(-1, 3, 32, 32).
    return y[:B].reshape(-1, 3, 32, 32)


def init_params(key, z_dim, hidden_1, hidden_2):
    """Deterministic init mimicking nn.Linear's U(-1/sqrt(fan_in), +1/sqrt(fan_in)).
    Weights stored as (in_dim, out_dim), biases as (1, out_dim)."""
    ks = jax.random.split(key, 6)

    def linear(kw, kb, fan_in, fan_out):
        bound = 1.0 / jnp.sqrt(fan_in)
        w = jax.random.uniform(kw, (fan_in, fan_out), jnp.float32, -bound, bound)
        b = jax.random.uniform(kb, (1, fan_out), jnp.float32, -bound, bound)
        return w, b

    w1, b1 = linear(ks[0], ks[1], z_dim, hidden_2)      # fc1: z_dim -> hidden_2
    w2, b2 = linear(ks[2], ks[3], hidden_2, hidden_1)   # fc2: hidden_2 -> hidden_1
    w3, b3 = linear(ks[4], ks[5], hidden_1, OUT_DIM)    # fc3: hidden_1 -> 3072
    return (w1, b1, w2, b2, w3, b3)


def _ref_forward(z, params):
    """Plain-JAX reference mirroring the kernel's bf16-weight / f32-accum math."""
    w1, b1, w2, b2, w3, b3 = params
    bf = jnp.bfloat16
    f32 = jnp.float32
    h1 = jnp.maximum(
        jnp.dot(z.astype(bf), w1.astype(bf), preferred_element_type=f32) + b1, 0.0)
    h2 = jnp.maximum(
        jnp.dot(h1.astype(bf), w2.astype(bf), preferred_element_type=f32) + b2, 0.0)
    y = jax.nn.sigmoid(
        jnp.dot(h2.astype(bf), w3.astype(bf), preferred_element_type=f32) + b3)
    return y.reshape(-1, 3, 32, 32)


if __name__ == "__main__":
    # Small shapes consistent with the module's forward.
    B, z_dim, hidden_1, hidden_2 = 8, 16, 64, 32

    key = jax.random.PRNGKey(0)
    k_params, k_z = jax.random.split(key)
    params = init_params(k_params, z_dim, hidden_1, hidden_2)
    z = jax.random.normal(k_z, (B, z_dim), jnp.float32)

    ref = _ref_forward(z, params)

    # Default f32 output path (PyTorch parity).
    out = decoder_cifar10_forward(z, params)
    out = jax.block_until_ready(out)
    assert out.shape == (B, 3, 32, 32), out.shape
    assert jnp.allclose(out, ref, atol=5e-3), "f32 output mismatch vs reference"

    # Optional bf16 output path (halves HBM writeback; looser tolerance).
    out_bf16 = decoder_cifar10_forward(z, params, out_dtype=jnp.bfloat16)
    out_bf16 = jax.block_until_ready(out_bf16)
    assert out_bf16.shape == (B, 3, 32, 32), out_bf16.shape
    assert jnp.allclose(out_bf16.astype(jnp.float32), ref, atol=1e-2), \
        "bf16 output mismatch vs reference"

    print("KERNEL_OK")
</pallas_src>

<mosaic_0001>
module attributes {stable_mosaic.version = 11 : i64} {
  func.func @decoder_kernel(%arg0: i32, %arg1: memref<16x16xf32, #tpu.memory_space<vmem>>, %arg2: memref<16x32xbf16, #tpu.memory_space<vmem>>, %arg3: memref<1x32xf32, #tpu.memory_space<vmem>>, %arg4: memref<32x64xbf16, #tpu.memory_space<vmem>>, %arg5: memref<1x64xf32, #tpu.memory_space<vmem>>, %arg6: memref<64x3072xbf16, #tpu.memory_space<vmem>>, %arg7: memref<1x3072xf32, #tpu.memory_space<vmem>>, %arg8: memref<16x3072xf32, #tpu.memory_space<vmem>>) attributes {dimension_semantics = [#tpu.dimension_semantics<parallel>], iteration_bounds = array<i64: 1>, scalar_prefetch = 0 : i64, scratch_operands = 0 : i64, tpu.core_type = #tpu.core_type<tc>, window_params = [{transform_indices = @transform_0, window_bounds = array<i64: 16, 16>}, {pipeline_mode = #tpu.pipeline_mode<synchronous>, transform_indices = @transform_1, window_bounds = array<i64: 16, 32>}, {pipeline_mode = #tpu.pipeline_mode<synchronous>, transform_indices = @transform_2, window_bounds = array<i64: 1, 32>}, {pipeline_mode = #tpu.pipeline_mode<synchronous>, transform_indices = @transform_3, window_bounds = array<i64: 32, 64>}, {pipeline_mode = #tpu.pipeline_mode<synchronous>, transform_indices = @transform_4, window_bounds = array<i64: 1, 64>}, {pipeline_mode = #tpu.pipeline_mode<synchronous>, transform_indices = @transform_5, window_bounds = array<i64: 64, 3072>}, {pipeline_mode = #tpu.pipeline_mode<synchronous>, transform_indices = @transform_6, window_bounds = array<i64: 1, 3072>}, {transform_indices = @transform_7, window_bounds = array<i64: 16, 3072>}]} {
    %c0 = arith.constant 0 : index
    %c0_0 = arith.constant 0 : index
    %0 = vector.load %arg1[%c0, %c0_0] : memref<16x16xf32, #tpu.memory_space<vmem>>, vector<16x16xf32>
    %1 = arith.truncf %0 : vector<16x16xf32> to vector<16x16xbf16>
    %c0_1 = arith.constant 0 : index
    %c0_2 = arith.constant 0 : index
    %2 = vector.load %arg2[%c0_1, %c0_2] : memref<16x32xbf16, #tpu.memory_space<vmem>>, vector<16x32xbf16>
    %cst = arith.constant dense<0.000000e+00> : vector<16x32xf32>
    %3 = tpu.matmul %1, %2, %cst {dimension_numbers = #tpu.dot_dimension_numbers<[1], [0], [0], [1], [0, 0, 1, 1], [], []>} : vector<16x16xbf16>, vector<16x32xbf16>, vector<16x32xf32> -> vector<16x32xf32>
    %c0_3 = arith.constant 0 : index
    %c0_4 = arith.constant 0 : index
    %4 = vector.load %arg3[%c0_3, %c0_4] : memref<1x32xf32, #tpu.memory_space<vmem>>, vector<1x32xf32>
    %5 = vector.broadcast %4 : vector<1x32xf32> to vector<16x32xf32>
    %6 = arith.addf %3, %5 : vector<16x32xf32>
    %cst_5 = arith.constant 0.000000e+00 : f32
    %7 = vector.broadcast %cst_5 : f32 to vector<16x32xf32>
    %8 = arith.maximumf %6, %7 : vector<16x32xf32>
    %9 = arith.truncf %8 : vector<16x32xf32> to vector<16x32xbf16>
    %c0_6 = arith.constant 0 : index
    %c0_7 = arith.constant 0 : index
    %10 = vector.load %arg4[%c0_6, %c0_7] : memref<32x64xbf16, #tpu.memory_space<vmem>>, vector<32x64xbf16>
    %cst_8 = arith.constant dense<0.000000e+00> : vector<16x64xf32>
    %11 = tpu.matmul %9, %10, %cst_8 {dimension_numbers = #tpu.dot_dimension_numbers<[1], [0], [0], [1], [0, 0, 1, 1], [], []>} : vector<16x32xbf16>, vector<32x64xbf16>, vector<16x64xf32> -> vector<16x64xf32>
    %c0_9 = arith.constant 0 : index
    %c0_10 = arith.constant 0 : index
    %12 = vector.load %arg5[%c0_9, %c0_10] : memref<1x64xf32, #tpu.memory_space<vmem>>, vector<1x64xf32>
    %13 = vector.broadcast %12 : vector<1x64xf32> to vector<16x64xf32>
    %14 = arith.addf %11, %13 : vector<16x64xf32>
    %cst_11 = arith.constant 0.000000e+00 : f32
    %15 = vector.broadcast %cst_11 : f32 to vector<16x64xf32>
    %16 = arith.maximumf %14, %15 : vector<16x64xf32>
    %17 = arith.truncf %16 : vector<16x64xf32> to vector<16x64xbf16>
    %c0_12 = arith.constant 0 : index
    %c0_13 = arith.constant 0 : index
    %18 = vector.load %arg6[%c0_12, %c0_13] : memref<64x3072xbf16, #tpu.memory_space<vmem>>, vector<64x3072xbf16>
    %cst_14 = arith.constant dense<0.000000e+00> : vector<16x3072xf32>
    %19 = tpu.matmul %17, %18, %cst_14 {dimension_numbers = #tpu.dot_dimension_numbers<[1], [0], [0], [1], [0, 0, 1, 1], [], []>} : vector<16x64xbf16>, vector<64x3072xbf16>, vector<16x3072xf32> -> vector<16x3072xf32>
    %c0_15 = arith.constant 0 : index
    %c0_16 = arith.constant 0 : index
    %20 = vector.load %arg7[%c0_15, %c0_16] : memref<1x3072xf32, #tpu.memory_space<vmem>>, vector<1x3072xf32>
    %21 = vector.broadcast %20 : vector<1x3072xf32> to vector<16x3072xf32>
    %22 = arith.addf %19, %21 : vector<16x3072xf32>
    %cst_17 = arith.constant 0.000000e+00 : f32
    %23 = vector.broadcast %cst_17 : f32 to vector<16x3072xf32>
    %24 = arith.subf %23, %22 : vector<16x3072xf32>
    %25 = math.exp %24 : vector<16x3072xf32>
    %cst_18 = arith.constant 1.000000e+00 : f32
    %26 = vector.broadcast %cst_18 : f32 to vector<16x3072xf32>
    %27 = arith.addf %26, %25 : vector<16x3072xf32>
    %28 = tpu.reciprocal %27 {approx = true} : vector<16x3072xf32> -> vector<16x3072xf32>
    %c0_19 = arith.constant 0 : index
    %c0_20 = arith.constant 0 : index
    %29 = vector.load %arg8[%c0_19, %c0_20] : memref<16x3072xf32, #tpu.memory_space<vmem>>, vector<16x3072xf32>
    tpu.vector_store %arg8[%c0_19, %c0_20], %28 {strides = array<i32>} : memref<16x3072xf32, #tpu.memory_space<vmem>>, vector<16x3072xf32>,
    return
  }
  func.func @transform_0(%arg0: i32) -> (i32, i32) {
    %c0_i32 = arith.constant 0 : i32
    %c0_i32_0 = arith.constant 0 : i32
    return %arg0, %c0_i32 : i32, i32
  }
  func.func @transform_1(%arg0: i32) -> (i32, i32) {
    %c0_i32 = arith.constant 0 : i32
    %c0_i32_0 = arith.constant 0 : i32
    %c0_i32_1 = arith.constant 0 : i32
    return %c0_i32, %c0_i32_0 : i32, i32
  }
  func.func @transform_2(%arg0: i32) -> (i32, i32) {
    %c0_i32 = arith.constant 0 : i32
    %c0_i32_0 = arith.constant 0 : i32
    %c0_i32_1 = arith.constant 0 : i32
    return %c0_i32, %c0_i32_0 : i32, i32
  }
  func.func @transform_3(%arg0: i32) -> (i32, i32) {
    %c0_i32 = arith.constant 0 : i32
    %c0_i32_0 = arith.constant 0 : i32
    %c0_i32_1 = arith.constant 0 : i32
    return %c0_i32, %c0_i32_0 : i32, i32
  }
  func.func @transform_4(%arg0: i32) -> (i32, i32) {
    %c0_i32 = arith.constant 0 : i32
    %c0_i32_0 = arith.constant 0 : i32
    %c0_i32_1 = arith.constant 0 : i32
    return %c0_i32, %c0_i32_0 : i32, i32
  }
  func.func @transform_5(%arg0: i32) -> (i32, i32) {
    %c0_i32 = arith.constant 0 : i32
    %c0_i32_0 = arith.constant 0 : i32
    %c0_i32_1 = arith.constant 0 : i32
    return %c0_i32, %c0_i32_0 : i32, i32
  }
  func.func @transform_6(%arg0: i32) -> (i32, i32) {
    %c0_i32 = arith.constant 0 : i32
    %c0_i32_0 = arith.constant 0 : i32
    %c0_i32_1 = arith.constant 0 : i32
    return %c0_i32, %c0_i32_0 : i32, i32
  }
  func.func @transform_7(%arg0: i32) -> (i32, i32) {
    %c0_i32 = arith.constant 0 : i32
    %c0_i32_0 = arith.constant 0 : i32
    return %arg0, %c0_i32 : i32, i32
  }
}

</mosaic_0001>

<llo_original>
// kernel: tpu_custom_call.1
$region0: #{tpu_custom_call.1}
  #allocation0 [shape = 'u32[]', space=smem, size = 0x4, offset = 0x4, fixed_abs, tag = 'smem constant byte address 0x4 - core index']
  #allocation1 [shape = 'u32[72,128]{1,0:T(1,128)}', space=vmem, size = 0x9000, scoped, tag = 'internal scratch']
  %s0 = inlined_call_operand.hbm [shape: f32[16,16], index: 0, kind: input, shape index: {}]
  %s1 = inlined_call_operand.hbm [shape: bf16[16,32], index: 1, kind: input, shape index: {}]
  %s2 = inlined_call_operand.vmem [shape: f32[1,32], index: 2, kind: input, shape index: {}]
  %s3 = inlined_call_operand.hbm [shape: bf16[32,64], index: 3, kind: input, shape index: {}]
  %s4 = inlined_call_operand.vmem [shape: f32[1,64], index: 4, kind: input, shape index: {}]
  %s5 = inlined_call_operand.hbm [shape: bf16[64,3072], index: 5, kind: input, shape index: {}]
  %s6 = inlined_call_operand.hbm [shape: f32[1,3072], index: 6, kind: input, shape index: {}]
  %s7 = inlined_call_operand.hbm [shape: f32[16,3072], index: 7, kind: output, shape index: {}]
  %s8 = sld [smem:[#allocation0]]
  $region58: #{tpu_custom_call.1} parent=0
    _
  %s10 = ssub.s32 1, %s8
  %s11 = scalar_select 0, %s10, %s8
  $region1: #{tpu_custom_call.1} parent=0
    #allocation2 [shape = 'u8[8192]{0}', space=vmem, size = 0x2000, scoped, tag = 'input window, operand 0, single buffered']
    #allocation3 [shape = 's32[1]{0}', space=sflag, size = 0x4, scoped, tag = 'scoped memory for tpu_custom_call.1']
    #allocation4 [shape = 's32[1]{0}', space=sflag, size = 0x4, scoped, tag = 'scoped memory for tpu_custom_call.1']
    #allocation5 [shape = 'u8[4096]{0}', space=vmem, size = 0x1000, scoped, tag = 'input window, operand 1, single buffered']
    #allocation6 [shape = 's32[1]{0}', space=sflag, size = 0x4, scoped, tag = 'scoped memory for tpu_custom_call.1']
    #allocation7 [shape = 'u8[8192]{0}', space=vmem, size = 0x2000, scoped, tag = 'input window, operand 3, single buffered']
    #allocation8 [shape = 'u8[393216]{0}', space=vmem, size = 0x60000, scoped, tag = 'input window, operand 5, single buffered']
    #allocation9 [shape = 's32[1]{0}', space=sflag, size = 0x4, scoped, tag = 'scoped memory for tpu_custom_call.1']
    #allocation10 [shape = 'u8[12288]{0}', space=vmem, size = 0x3000, scoped, tag = 'input window, operand 6, single buffered']
    #allocation11 [shape = 'u8[196608]{0}', space=vmem, size = 0x30000, scoped, tag = 'output window, operand 0, single buffered']
    %12 = vsyncpa [#allocation3], 0
    %13 = vsyncpa [#allocation6], 0
    %14 = vsyncpa [#allocation9], 0
    %15 = vsyncpa [#allocation4], 0
    // Predicated region
    $region2: #{tpu_custom_call.1} parent=1 // pred_check
      _
    $region3: #{tpu_custom_call.1} parent=1 // pred_check_branch
      %17 = sbr.rel (0) target = $region5
    $region4: #{tpu_custom_call.1} parent=1 // pred_region
      %19 = vsyncadd [#allocation3], 0
      %s20 = sshll.u32 %s0, 4
      %s21 = int_to_ptr.hbm [resolvable:$true] %s20
      %s22 = sshll.u32 [#allocation2], 4
      %s23 = int_to_ptr.vmem [resolvable:$true] %s22
      %28 = dma.hbm_to_vmem [thread:$0]  %s21, 256, %s23, [#allocation3], 128, 128, 8
    $region5: #{tpu_custom_call.1} parent=1 // pred_fallthru
      _
    // Predicated region
    $region6: #{tpu_custom_call.1} parent=1 // pred_check
      _
    $region7: #{tpu_custom_call.1} parent=1 // pred_check_branch
      %30 = sbr.rel (0) target = $region9
    $region8: #{tpu_custom_call.1} parent=1 // pred_region
      %32 = vsyncadd [#allocation6], 0
      %s33 = sshll.u32 %s1, 4
      %s34 = int_to_ptr.hbm [resolvable:$true] %s33
      %s35 = sshll.u32 [#allocation5], 4
      %s36 = int_to_ptr.vmem [resolvable:$true] %s35
      %41 = dma.hbm_to_vmem [thread:$0]  %s34, 128, %s36, [#allocation6], 64, 64, 4
    $region9: #{tpu_custom_call.1} parent=1 // pred_fallthru
      _
    // Predicated region
    $region10: #{tpu_custom_call.1} parent=1 // pred_check
      _
    $region11: #{tpu_custom_call.1} parent=1 // pred_check_branch
      %43 = sbr.rel (0) target = $region13
    $region12: #{tpu_custom_call.1} parent=1 // pred_region
      _
    $region13: #{tpu_custom_call.1} parent=1 // pred_fallthru
      _
    // Predicated region
    $region14: #{tpu_custom_call.1} parent=1 // pred_check
      _
    $region15: #{tpu_custom_call.1} parent=1 // pred_check_branch
      %45 = sbr.rel (0) target = $region17
    $region16: #{tpu_custom_call.1} parent=1 // pred_region
      %47 = vsyncadd [#allocation6], 0
      %s48 = sshll.u32 %s3, 4
      %s49 = int_to_ptr.hbm [resolvable:$true] %s48
      %s50 = sshll.u32 [#allocation7], 4
      %s51 = int_to_ptr.vmem [resolvable:$true] %s50
      %56 = dma.hbm_to_vmem [thread:$0]  %s49, 256, %s51, [#allocation6], 64, 64, 4
    $region17: #{tpu_custom_call.1} parent=1 // pred_fallthru
      _
    // Predicated region
    $region18: #{tpu_custom_call.1} parent=1 // pred_check
      _
    $region19: #{tpu_custom_call.1} parent=1 // pred_check_branch
      %58 = sbr.rel (0) target = $region21
    $region20: #{tpu_custom_call.1} parent=1 // pred_region
      _
    $region21: #{tpu_custom_call.1} parent=1 // pred_fallthru
      _
    // Predicated region
    $region22: #{tpu_custom_call.1} parent=1 // pred_check
      _
    $region23: #{tpu_custom_call.1} parent=1 // pred_check_branch
      %60 = sbr.rel (0) target = $region25
    $region24: #{tpu_custom_call.1} parent=1 // pred_region
      %62 = vsyncadd [#allocation9], 0
      %s63 = sshll.u32 %s5, 4
      %s64 = int_to_ptr.hbm [resolvable:$true] %s63
      %s65 = sshll.u32 [#allocation8], 4
      %s66 = int_to_ptr.vmem [resolvable:$true] %s65
      %71 = dma.hbm_to_vmem [thread:$0]  %s64, 12288, %s66, [#allocation9], 1536, 1536, 96
    $region25: #{tpu_custom_call.1} parent=1 // pred_fallthru
      _
    // Predicated region
    $region26: #{tpu_custom_call.1} parent=1 // pred_check
      _
    $region27: #{tpu_custom_call.1} parent=1 // pred_check_branch
      %73 = sbr.rel (0) target = $region29
    $region28: #{tpu_custom_call.1} parent=1 // pred_region
      %75 = vsyncadd [#allocation9], 0
      %s77 = sshll.u32 %s6, 4
      %s78 = int_to_ptr.hbm [resolvable:$true] %s77
      %s79 = sshll.u32 [#allocation10], 4
      %s80 = int_to_ptr.vmem [resolvable:$true] %s79
      %82 = dma.hbm_to_vmem [thread:$0]  %s78, 384, %s80, [#allocation9]
    $region29: #{tpu_custom_call.1} parent=1 // pred_fallthru
      _
    // Predicated region
    $region30: #{tpu_custom_call.1} parent=1 // pred_check
      _
    $region31: #{tpu_custom_call.1} parent=1 // pred_check_branch
      %84 = sbr.rel (0) target = $region33
    $region32: #{tpu_custom_call.1} parent=1 // pred_region
      %86 = dma.done [#allocation3], 256
    $region33: #{tpu_custom_call.1} parent=1 // pred_fallthru
      _
    // Predicated region
    $region34: #{tpu_custom_call.1} parent=1 // pred_check
      _
    $region35: #{tpu_custom_call.1} parent=1 // pred_check_branch
      %88 = sbr.rel (0) target = $region37
    $region36: #{tpu_custom_call.1} parent=1 // pred_region
      %90 = dma.done [#allocation6], 128
    $region37: #{tpu_custom_call.1} parent=1 // pred_fallthru
      _
    // Predicated region
    $region38: #{tpu_custom_call.1} parent=1 // pred_check
      _
    $region39: #{tpu_custom_call.1} parent=1 // pred_check_branch
      %92 = sbr.rel (0) target = $region41
    $region40: #{tpu_custom_call.1} parent=1 // pred_region
      %94 = dma.done [#allocation6], 256
    $region41: #{tpu_custom_call.1} parent=1 // pred_fallthru
      _
    // Predicated region
    $region42: #{tpu_custom_call.1} parent=1 // pred_check
      _
    $region43: #{tpu_custom_call.1} parent=1 // pred_check_branch
      %96 = sbr.rel (0) target = $region45
    $region44: #{tpu_custom_call.1} parent=1 // pred_region
      %98 = dma.done [#allocation9], 12288
    $region45: #{tpu_custom_call.1} parent=1 // pred_fallthru
      _
    // Predicated region
    $region46: #{tpu_custom_call.1} parent=1 // pred_check
      _
    $region47: #{tpu_custom_call.1} parent=1 // pred_check_branch
      %100 = sbr.rel (0) target = $region49
    $region48: #{tpu_custom_call.1} parent=1 // pred_region
      %102 = dma.done [#allocation9], 384
    $region49: #{tpu_custom_call.1} parent=1 // pred_fallthru
      _
    %v104 = vld [vmem:[#allocation2] sm:$0xff]
    %v105 = vld [vmem:[#allocation2 + $0x8] sm:$0xff]
    %v106 = vpack.c.bf16 %v105, %v104
    %v107 = vld [vmem:[#allocation5] sm:$0xf]
    %v108 = vld [vmem:[#allocation5 + $0x4] sm:$0xf]
    %v109 = vld [vmem:[%s2] sm:$0x1]
    %v111 = vperm.slane %v109, 0
    %v115 = vunpack.c.l.b16 %v107
    %v116 = vunpack.c.l.b16 %v108
    %v117 = vpack.c.b16 %v116, %v115
    %vm119 = vcmask 130048
    %v121 = vsel %vm119, %v106, 0
    %123 = vmatpush.bf16.msra.mxu0 0
    %124 = vmatpush.bf16.msra.mxu0 0
    %125 = vmatpush.bf16.msra.mxu0 0
    %126 = vmatpush.bf16.msra.mxu0 0
    %127 = vmatpush.bf16.msra.mxu0 0
    %128 = vmatpush.bf16.msra.mxu0 0
    %129 = vmatpush.bf16.msra.mxu0 0
    %130 = vmatpush.bf16.msra.mxu0 %v117
    %131 = vmatmul.bf16.gmra.mxu0 %v121
    %v132 = vpop.f32.mrf.mxu0
    %v133 = vadd.f32 %v111, %v132
    %v134 = vpop.f32.mrf.mxu0
    %v135 = vadd.f32 %v111, %v134
    %136 = vdwg.mxu0
    %v137 = vmax.f32 %v133, 0.0
    %v138 = vmax.f32 %v135, 0.0
    %v139 = vpack.c.bf16 %v138, %v137
    %v140 = vld [vmem:[#allocation7] sm:$0xf]
    %v141 = vld [vmem:[#allocation7 + $0x4] sm:$0xf]
    %v142 = vld [vmem:[#allocation7 + $0x8] sm:$0xf]
    %v143 = vld [vmem:[#allocation7 + $0xc] sm:$0xf]
    %v144 = vld [vmem:[%s4] sm:$0x1]
    %v146 = vperm.slane %v144, 0
    %v152 = vunpack.c.l.b16 %v140
    %v153 = vunpack.c.l.b16 %v141
    %v154 = vunpack.c.l.b16 %v142
    %v155 = vunpack.c.l.b16 %v143
    %v156 = vpack.c.b16 %v153, %v152
    %v157 = vpack.c.b16 %v155, %v154
    %vm160 = vcmask 261120
    %v162 = vsel %vm160, %v139, 0
    %164 = vmatpush.bf16.msra.mxu0 0
    %165 = vmatpush.bf16.msra.mxu0 0
    %166 = vmatpush.bf16.msra.mxu0 0
    %167 = vmatpush.bf16.msra.mxu0 0
    %168 = vmatpush.bf16.msra.mxu0 0
    %169 = vmatpush.bf16.msra.mxu0 0
    %170 = vmatpush.bf16.msra.mxu0 %v157
    %171 = vmatpush.bf16.msra.mxu0 %v156
    %172 = vmatmul.bf16.gmra.mxu0 %v162
    %v173 = vpop.f32.mrf.mxu0
    %v174 = vadd.f32 %v146, %v173
    %v175 = vpop.f32.mrf.mxu0
    %v176 = vadd.f32 %v146, %v175
    %177 = vdwg.mxu0
    %v178 = vmax.f32 %v174, 0.0
    %v179 = vmax.f32 %v176, 0.0
    %v180 = vpack.c.bf16 %v179, %v178
    %v181 = vld [vmem:[#allocation8] sm:$0xff]
    %v182 = vld [vmem:[#allocation8 + $0x8] sm:$0xff]
    %v183 = vld [vmem:[#allocation8 + $0x10] sm:$0xff]
    %v184 = vld [vmem:[#allocation8 + $0x18] sm:$0xff]
    %v185 = vld [vmem:[#allocation8 + $0x20] sm:$0xff]
    %v186 = vld [vmem:[#allocation8 + $0x28] sm:$0xff]
    %v187 = vld [vmem:[#allocation8 + $0x30] sm:$0xff]
    %v188 = vld [vmem:[#allocation8 + $0x38] sm:$0xff]
    %v189 = vld [vmem:[#allocation8 + $0x40] sm:$0xff]
    %v190 = vld [vmem:[#allocation8 + $0x48] sm:$0xff]
    %v191 = vld [vmem:[#allocation8 + $0x50] sm:$0xff]
    %v192 = vld [vmem:[#allocation8 + $0x58] sm:$0xff]
    %v193 = vld [vmem:[#allocation8 + $0x60] sm:$0xff]
    %v194 = vld [vmem:[#allocation8 + $0x68] sm:$0xff]
    %v195 = vld [vmem:[#allocation8 + $0x70] sm:$0xff]
    %v196 = vld [vmem:[#allocation8 + $0x78] sm:$0xff]
    %v197 = vld [vmem:[#allocation8 + $0x80] sm:$0xff]
    %v198 = vld [vmem:[#allocation8 + $0x88] sm:$0xff]
    %v199 = vld [vmem:[#allocation8 + $0x90] sm:$0xff]
    %v200 = vld [vmem:[#allocation8 + $0x98] sm:$0xff]
    %v201 = vld [vmem:[#allocation8 + $0xa0] sm:$0xff]
    %v202 = vld [vmem:[#allocation8 + $0xa8] sm:$0xff]
    %v203 = vld [vmem:[#allocation8 + $0xb0] sm:$0xff]
    %v204 = vld [vmem:[#allocation8 + $0xb8] sm:$0xff]
    %v205 = vld [vmem:[#allocation8 + $0xc0] sm:$0xff]
    %v206 = vld [vmem:[#allocation8 + $0xc8] sm:$0xff]
    %v207 = vld [vmem:[#allocation8 + $0xd0] sm:$0xff]
    %v208 = vld [vmem:[#allocation8 + $0xd8] sm:$0xff]
    %v209 = vld [vmem:[#allocation8 + $0xe0] sm:$0xff]
    %v210 = vld [vmem:[#allocation8 + $0xe8] sm:$0xff]
    %v211 = vld [vmem:[#allocation8 + $0xf0] sm:$0xff]
    %v212 = vld [vmem:[#allocation8 + $0xf8] sm:$0xff]
    %v213 = vld [vmem:[#allocation8 + $0x100] sm:$0xff]
    %v214 = vld [vmem:[#allocation8 + $0x108] sm:$0xff]
    %v215 = vld [vmem:[#allocation8 + $0x110] sm:$0xff]
    %v216 = vld [vmem:[#allocation8 + $0x118] sm:$0xff]
    %v217 = vld [vmem:[#allocation8 + $0x120] sm:$0xff]
    %v218 = vld [vmem:[#allocation8 + $0x128] sm:$0xff]
    %v219 = vld [vmem:[#allocation8 + $0x130] sm:$0xff]
    %v220 = vld [vmem:[#allocation8 + $0x138] sm:$0xff]
    %v221 = vld [vmem:[#allocation8 + $0x140] sm:$0xff]
    %v222 = vld [vmem:[#allocation8 + $0x148] sm:$0xff]
    %v223 = vld [vmem:[#allocation8 + $0x150] sm:$0xff]
    %v224 = vld [vmem:[#allocation8 + $0x158] sm:$0xff]
    %v225 = vld [vmem:[#allocation8 + $0x160] sm:$0xff]
    %v226 = vld [vmem:[#allocation8 + $0x168] sm:$0xff]
    %v227 = vld [vmem:[#allocation8 + $0x170] sm:$0xff]
    %v228 = vld [vmem:[#allocation8 + $0x178] sm:$0xff]
    %v229 = vld [vmem:[#allocation8 + $0x180] sm:$0xff]
    %v230 = vld [vmem:[#allocation8 + $0x188] sm:$0xff]
    %v231 = vld [vmem:[#allocation8 + $0x190] sm:$0xff]
    %v232 = vld [vmem:[#allocation8 + $0x198] sm:$0xff]
    %v233 = vld [vmem:[#allocation8 + $0x1a0] sm:$0xff]
    %v234 = vld [vmem:[#allocation8 + $0x1a8] sm:$0xff]
    %v235 = vld [vmem:[#allocation8 + $0x1b0] sm:$0xff]
    %v236 = vld [vmem:[#allocation8 + $0x1b8] sm:$0xff]
    %v237 = vld [vmem:[#allocation8 + $0x1c0] sm:$0xff]
    %v238 = vld [vmem:[#allocation8 + $0x1c8] sm:$0xff]
    %v239 = vld [vmem:[#allocation8 + $0x1d0] sm:$0xff]
    %v240 = vld [vmem:[#allocation8 + $0x1d8] sm:$0xff]
    %v241 = vld [vmem:[#allocation8 + $0x1e0] sm:$0xff]
    %v242 = vld [vmem:[#allocation8 + $0x1e8] sm:$0xff]
    %v243 = vld [vmem:[#allocation8 + $0x1f0] sm:$0xff]
    %v244 = vld [vmem:[#allocation8 + $0x1f8] sm:$0xff]
    %v245 = vld [vmem:[#allocation8 + $0x200] sm:$0xff]
    %v246 = vld [vmem:[#allocation8 + $0x208] sm:$0xff]
    %v247 = vld [vmem:[#allocation8 + $0x210] sm:$0xff]
    %v248 = vld [vmem:[#allocation8 + $0x218] sm:$0xff]
    %v249 = vld [vmem:[#allocation8 + $0x220] sm:$0xff]
    %v250 = vld [vmem:[#allocation8 + $0x228] sm:$0xff]
    %v251 = vld [vmem:[#allocation8 + $0x230] sm:$0xff]
    %v252 = vld [vmem:[#allocation8 + $0x238] sm:$0xff]
    %v253 = vld [vmem:[#allocation8 + $0x240] sm:$0xff]
    %v254 = vld [vmem:[#allocation8 + $0x248] sm:$0xff]
    %v255 = vld [vmem:[#allocation8 + $0x250] sm:$0xff]
    %v256 = vld [vmem:[#allocation8 + $0x258] sm:$0xff]
    %v257 = vld [vmem:[#allocation8 + $0x260] sm:$0xff]
    %v258 = vld [vmem:[#allocation8 + $0x268] sm:$0xff]
    %v259 = vld [vmem:[#allocation8 + $0x270] sm:$0xff]
    %v260 = vld [vmem:[#allocation8 + $0x278] sm:$0xff]
    %v261 = vld [vmem:[#allocation8 + $0x280] sm:$0xff]
    %v262 = vld [vmem:[#allocation8 + $0x288] sm:$0xff]
    %v263 = vld [vmem:[#allocation8 + $0x290] sm:$0xff]
    %v264 = vld [vmem:[#allocation8 + $0x298] sm:$0xff]
    %v265 = vld [vmem:[#allocation8 + $0x2a0] sm:$0xff]
    %v266 = vld [vmem:[#allocation8 + $0x2a8] sm:$0xff]
    %v267 = vld [vmem:[#allocation8 + $0x2b0] sm:$0xff]
    %v268 = vld [vmem:[#allocation8 + $0x2b8] sm:$0xff]
    %v269 = vld [vmem:[#allocation8 + $0x2c0] sm:$0xff]
    %v270 = vld [vmem:[#allocation8 + $0x2c8] sm:$0xff]
    %v271 = vld [vmem:[#allocation8 + $0x2d0] sm:$0xff]
    %v272 = vld [vmem:[#allocation8 + $0x2d8] sm:$0xff]
    %v273 = vld [vmem:[#allocation8 + $0x2e0] sm:$0xff]
    %v274 = vld [vmem:[#allocation8 + $0x2e8] sm:$0xff]
    %v275 = vld [vmem:[#allocation8 + $0x2f0] sm:$0xff]
    %v276 = vld [vmem:[#allocation8 + $0x2f8] sm:$0xff]
    %v277 = vld [vmem:[#allocation10] sm:$0xff]
    %v278 = vld [vmem:[#allocation10 + $0x8] sm:$0xff]
    %v279 = vld [vmem:[#allocation10 + $0x10] sm:$0xff]
    %v283 = vperm.slane %v277, 0
    %v284 = vperm.slane %v277, 1
    %v285 = vperm.slane %v277, 2
    %v286 = vperm.slane %v277, 3
    %v287 = vperm.slane %v277, 4
    %v288 = vperm.slane %v277, 5
    %v289 = vperm.slane %v277, 6
    %v290 = vperm.slane %v277, 7
    %v291 = vperm.slane %v278, 0
    %v292 = vperm.slane %v278, 1
    %v293 = vperm.slane %v278, 2
    %v294 = vperm.slane %v278, 3
    %v295 = vperm.slane %v278, 4
    %v296 = vperm.slane %v278, 5
    %v297 = vperm.slane %v278, 6
    %v298 = vperm.slane %v278, 7
    %v299 = vperm.slane %v279, 0
    %v300 = vperm.slane %v279, 1
    %v301 = vperm.slane %v279, 2
    %v302 = vperm.slane %v279, 3
    %v303 = vperm.slane %v279, 4
    %v304 = vperm.slane %v279, 5
    %v305 = vperm.slane %v279, 6
    %v306 = vperm.slane %v279, 7
    %v427 = vunpack.c.l.b16 %v181
    %v428 = vunpack.c.h.b16 %v181
    %v429 = vunpack.c.l.b16 %v182
    %v430 = vunpack.c.h.b16 %v182
    %v431 = vunpack.c.l.b16 %v183
    %v432 = vunpack.c.h.b16 %v183
    %v433 = vunpack.c.l.b16 %v184
    %v434 = vunpack.c.h.b16 %v184
    %v435 = vunpack.c.l.b16 %v185
    %v436 = vunpack.c.h.b16 %v185
    %v437 = vunpack.c.l.b16 %v186
    %v438 = vunpack.c.h.b16 %v186
    %v439 = vunpack.c.l.b16 %v187
    %v440 = vunpack.c.h.b16 %v187
    %v441 = vunpack.c.l.b16 %v188
    %v442 = vunpack.c.h.b16 %v188
    %v443 = vunpack.c.l.b16 %v189
    %v444 = vunpack.c.h.b16 %v189
    %v445 = vunpack.c.l.b16 %v190
    %v446 = vunpack.c.h.b16 %v190
    %v447 = vunpack.c.l.b16 %v191
    %v448 = vunpack.c.h.b16 %v191
    %v449 = vunpack.c.l.b16 %v192
    %v450 = vunpack.c.h.b16 %v192
    %v451 = vunpack.c.l.b16 %v193
    %v452 = vunpack.c.h.b16 %v193
    %v453 = vunpack.c.l.b16 %v194
    %v454 = vunpack.c.h.b16 %v194
    %v455 = vunpack.c.l.b16 %v195
    %v456 = vunpack.c.h.b16 %v195
    %v457 = vunpack.c.l.b16 %v196
    %v458 = vunpack.c.h.b16 %v196
    %v459 = vunpack.c.l.b16 %v197
    %v460 = vunpack.c.h.b16 %v197
    %v461 = vunpack.c.l.b16 %v198
    %v462 = vunpack.c.h.b16 %v198
    %v463 = vunpack.c.l.b16 %v199
    %v464 = vunpack.c.h.b16 %v199
    %v465 = vunpack.c.l.b16 %v200
    %v466 = vunpack.c.h.b16 %v200
    %v467 = vunpack.c.l.b16 %v201
    %v468 = vunpack.c.h.b16 %v201
    %v469 = vunpack.c.l.b16 %v202
    %v470 = vunpack.c.h.b16 %v202
    %v471 = vunpack.c.l.b16 %v203
    %v472 = vunpack.c.h.b16 %v203
    %v473 = vunpack.c.l.b16 %v204
    %v474 = vunpack.c.h.b16 %v204
    %v475 = vunpack.c.l.b16 %v205
    %v476 = vunpack.c.h.b16 %v205
    %v477 = vunpack.c.l.b16 %v206
    %v478 = vunpack.c.h.b16 %v206
    %v479 = vunpack.c.l.b16 %v207
    %v480 = vunpack.c.h.b16 %v207
    %v481 = vunpack.c.l.b16 %v208
    %v482 = vunpack.c.h.b16 %v208
    %v483 = vunpack.c.l.b16 %v209
    %v484 = vunpack.c.h.b16 %v209
    %v485 = vunpack.c.l.b16 %v210
    %v486 = vunpack.c.h.b16 %v210
    %v487 = vunpack.c.l.b16 %v211
    %v488 = vunpack.c.h.b16 %v211
    %v489 = vunpack.c.l.b16 %v212
    %v490 = vunpack.c.h.b16 %v212
    %v491 = vunpack.c.l.b16 %v213
    %v492 = vunpack.c.h.b16 %v213
    %v493 = vunpack.c.l.b16 %v214
    %v494 = vunpack.c.h.b16 %v214
    %v495 = vunpack.c.l.b16 %v215
    %v496 = vunpack.c.h.b16 %v215
    %v497 = vunpack.c.l.b16 %v216
    %v498 = vunpack.c.h.b16 %v216
    %v499 = vunpack.c.l.b16 %v217
    %v500 = vunpack.c.h.b16 %v217
    %v501 = vunpack.c.l.b16 %v218
    %v502 = vunpack.c.h.b16 %v218
    %v503 = vunpack.c.l.b16 %v219
    %v504 = vunpack.c.h.b16 %v219
    %v505 = vunpack.c.l.b16 %v220
    %v506 = vunpack.c.h.b16 %v220
    %v507 = vunpack.c.l.b16 %v221
    %v508 = vunpack.c.h.b16 %v221
    %v509 = vunpack.c.l.b16 %v222
    %v510 = vunpack.c.h.b16 %v222
    %v511 = vunpack.c.l.b16 %v223
    %v512 = vunpack.c.h.b16 %v223
    %v513 = vunpack.c.l.b16 %v224
    %v514 = vunpack.c.h.b16 %v224
    %v515 = vunpack.c.l.b16 %v225
    %v516 = vunpack.c.h.b16 %v225
    %v517 = vunpack.c.l.b16 %v226
    %v518 = vunpack.c.h.b16 %v226
    %v519 = vunpack.c.l.b16 %v227
    %v520 = vunpack.c.h.b16 %v227
    %v521 = vunpack.c.l.b16 %v228
    %v522 = vunpack.c.h.b16 %v228
    %v523 = vunpack.c.l.b16 %v229
    %v524 = vunpack.c.h.b16 %v229
    %v525 = vunpack.c.l.b16 %v230
    %v526 = vunpack.c.h.b16 %v230
    %v527 = vunpack.c.l.b16 %v231
    %v528 = vunpack.c.h.b16 %v231
    %v529 = vunpack.c.l.b16 %v232
    %v530 = vunpack.c.h.b16 %v232
    %v531 = vunpack.c.l.b16 %v233
    %v532 = vunpack.c.h.b16 %v233
    %v533 = vunpack.c.l.b16 %v234
    %v534 = vunpack.c.h.b16 %v234
    %v535 = vunpack.c.l.b16 %v235
    %v536 = vunpack.c.h.b16 %v235
    %v537 = vunpack.c.l.b16 %v236
    %v538 = vunpack.c.h.b16 %v236
    %v539 = vunpack.c.l.b16 %v237
    %v540 = vunpack.c.h.b16 %v237
    %v541 = vunpack.c.l.b16 %v238
    %v542 = vunpack.c.h.b16 %v238
    %v543 = vunpack.c.l.b16 %v239
    %v544 = vunpack.c.h.b16 %v239
    %v545 = vunpack.c.l.b16 %v240
    %v546 = vunpack.c.h.b16 %v240
    %v547 = vunpack.c.l.b16 %v241
    %v548 = vunpack.c.h.b16 %v241
    %v549 = vunpack.c.l.b16 %v242
    %v550 = vunpack.c.h.b16 %v242
    %v551 = vunpack.c.l.b16 %v243
    %v552 = vunpack.c.h.b16 %v243
    %v553 = vunpack.c.l.b16 %v244
    %v554 = vunpack.c.h.b16 %v244
    %v555 = vunpack.c.l.b16 %v245
    %v556 = vunpack.c.h.b16 %v245
    %v557 = vunpack.c.l.b16 %v246
    %v558 = vunpack.c.h.b16 %v246
    %v559 = vunpack.c.l.b16 %v247
    %v560 = vunpack.c.h.b16 %v247
    %v561 = vunpack.c.l.b16 %v248
    %v562 = vunpack.c.h.b16 %v248
    %v563 = vunpack.c.l.b16 %v249
    %v564 = vunpack.c.h.b16 %v249
    %v565 = vunpack.c.l.b16 %v250
    %v566 = vunpack.c.h.b16 %v250
    %v567 = vunpack.c.l.b16 %v251
    %v568 = vunpack.c.h.b16 %v251
    %v569 = vunpack.c.l.b16 %v252
    %v570 = vunpack.c.h.b16 %v252
    %v571 = vunpack.c.l.b16 %v253
    %v572 = vunpack.c.h.b16 %v253
    %v573 = vunpack.c.l.b16 %v254
    %v574 = vunpack.c.h.b16 %v254
    %v575 = vunpack.c.l.b16 %v255
    %v576 = vunpack.c.h.b16 %v255
    %v577 = vunpack.c.l.b16 %v256
    %v578 = vunpack.c.h.b16 %v256
    %v579 = vunpack.c.l.b16 %v257
    %v580 = vunpack.c.h.b16 %v257
    %v581 = vunpack.c.l.b16 %v258
    %v582 = vunpack.c.h.b16 %v258
    %v583 = vunpack.c.l.b16 %v259
    %v584 = vunpack.c.h.b16 %v259
    %v585 = vunpack.c.l.b16 %v260
    %v586 = vunpack.c.h.b16 %v260
    %v587 = vunpack.c.l.b16 %v261
    %v588 = vunpack.c.h.b16 %v261
    %v589 = vunpack.c.l.b16 %v262
    %v590 = vunpack.c.h.b16 %v262
    %v591 = vunpack.c.l.b16 %v263
    %v592 = vunpack.c.h.b16 %v263
    %v593 = vunpack.c.l.b16 %v264
    %v594 = vunpack.c.h.b16 %v264
    %v595 = vunpack.c.l.b16 %v265
    %v596 = vunpack.c.h.b16 %v265
    %v597 = vunpack.c.l.b16 %v266
    %v598 = vunpack.c.h.b16 %v266
    %v599 = vunpack.c.l.b16 %v267
    %v600 = vunpack.c.h.b16 %v267
    %v601 = vunpack.c.l.b16 %v268
    %v602 = vunpack.c.h.b16 %v268
    %v603 = vunpack.c.l.b16 %v269
    %v604 = vunpack.c.h.b16 %v269
    %v605 = vunpack.c.l.b16 %v270
    %v606 = vunpack.c.h.b16 %v270
    %v607 = vunpack.c.l.b16 %v271
    %v608 = vunpack.c.h.b16 %v271
    %v609 = vunpack.c.l.b16 %v272
    %v610 = vunpack.c.h.b16 %v272
    %v611 = vunpack.c.l.b16 %v273
    %v612 = vunpack.c.h.b16 %v273
    %v613 = vunpack.c.l.b16 %v274
    %v614 = vunpack.c.h.b16 %v274
    %v615 = vunpack.c.l.b16 %v275
    %v616 = vunpack.c.h.b16 %v275
    %v617 = vunpack.c.l.b16 %v276
    %v618 = vunpack.c.h.b16 %v276
    %v619 = vpack.c.b16 %v451, %v427
    %v620 = vpack.c.b16 %v452, %v428
    %v621 = vpack.c.b16 %v453, %v429
    %v622 = vpack.c.b16 %v454, %v430
    %v623 = vpack.c.b16 %v455, %v431
    %v624 = vpack.c.b16 %v456, %v432
    %v625 = vpack.c.b16 %v457, %v433
    %v626 = vpack.c.b16 %v458, %v434
    %v627 = vpack.c.b16 %v459, %v435
    %v628 = vpack.c.b16 %v460, %v436
    %v629 = vpack.c.b16 %v461, %v437
    %v630 = vpack.c.b16 %v462, %v438
    %v631 = vpack.c.b16 %v463, %v439
    %v632 = vpack.c.b16 %v464, %v440
    %v633 = vpack.c.b16 %v465, %v441
    %v634 = vpack.c.b16 %v466, %v442
    %v635 = vpack.c.b16 %v467, %v443
    %v636 = vpack.c.b16 %v468, %v444
    %v637 = vpack.c.b16 %v469, %v445
    %v638 = vpack.c.b16 %v470, %v446
    %v639 = vpack.c.b16 %v471, %v447
    %v640 = vpack.c.b16 %v472, %v448
    %v641 = vpack.c.b16 %v473, %v449
    %v642 = vpack.c.b16 %v474, %v450
    %v643 = vpack.c.b16 %v499, %v475
    %v644 = vpack.c.b16 %v500, %v476
    %v645 = vpack.c.b16 %v501, %v477
    %v646 = vpack.c.b16 %v502, %v478
    %v647 = vpack.c.b16 %v503, %v479
    %v648 = vpack.c.b16 %v504, %v480
    %v649 = vpack.c.b16 %v505, %v481
    %v650 = vpack.c.b16 %v506, %v482
    %v651 = vpack.c.b16 %v507, %v483
    %v652 = vpack.c.b16 %v508, %v484
    %v653 = vpack.c.b16 %v509, %v485
    %v654 = vpack.c.b16 %v510, %v486
    %v655 = vpack.c.b16 %v511, %v487
    %v656 = vpack.c.b16 %v512, %v488
    %v657 = vpack.c.b16 %v513, %v489
    %v658 = vpack.c.b16 %v514, %v490
    %v659 = vpack.c.b16 %v515, %v491
    %v660 = vpack.c.b16 %v516, %v492
    %v661 = vpack.c.b16 %v517, %v493
    %v662 = vpack.c.b16 %v518, %v494
    %v663 = vpack.c.b16 %v519, %v495
    %v664 = vpack.c.b16 %v520, %v496
    %v665 = vpack.c.b16 %v521, %v497
    %v666 = vpack.c.b16 %v522, %v498
    %v667 = vpack.c.b16 %v547, %v523
    %v668 = vpack.c.b16 %v548, %v524
    %v669 = vpack.c.b16 %v549, %v525
    %v670 = vpack.c.b16 %v550, %v526
    %v671 = vpack.c.b16 %v551, %v527
    %v672 = vpack.c.b16 %v552, %v528
    %v673 = vpack.c.b16 %v553, %v529
    %v674 = vpack.c.b16 %v554, %v530
    %v675 = vpack.c.b16 %v555, %v531
    %v676 = vpack.c.b16 %v556, %v532
    %v677 = vpack.c.b16 %v557, %v533
    %v678 = vpack.c.b16 %v558, %v534
    %v679 = vpack.c.b16 %v559, %v535
    %v680 = vpack.c.b16 %v560, %v536
    %v681 = vpack.c.b16 %v561, %v537
    %v682 = vpack.c.b16 %v562, %v538
    %v683 = vpack.c.b16 %v563, %v539
    %v684 = vpack.c.b16 %v564, %v540
    %v685 = vpack.c.b16 %v565, %v541
    %v686 = vpack.c.b16 %v566, %v542
    %v687 = vpack.c.b16 %v567, %v543
    %v688 = vpack.c.b16 %v568, %v544
    %v689 = vpack.c.b16 %v569, %v545
    %v690 = vpack.c.b16 %v570, %v546
    %v691 = vpack.c.b16 %v595, %v571
    %v692 = vpack.c.b16 %v596, %v572
    %v693 = vpack.c.b16 %v597, %v573
    %v694 = vpack.c.b16 %v598, %v574
    %v695 = vpack.c.b16 %v599, %v575
    %v696 = vpack.c.b16 %v600, %v576
    %v697 = vpack.c.b16 %v601, %v577
    %v698 = vpack.c.b16 %v602, %v578
    %v699 = vpack.c.b16 %v603, %v579
    %v700 = vpack.c.b16 %v604, %v580
    %v701 = vpack.c.b16 %v605, %v581
    %v702 = vpack.c.b16 %v606, %v582
    %v703 = vpack.c.b16 %v607, %v583
    %v704 = vpack.c.b16 %v608, %v584
    %v705 = vpack.c.b16 %v609, %v585
    %v706 = vpack.c.b16 %v610, %v586
    %v707 = vpack.c.b16 %v611, %v587
    %v708 = vpack.c.b16 %v612, %v588
    %v709 = vpack.c.b16 %v613, %v589
    %v710 = vpack.c.b16 %v614, %v590
    %v711 = vpack.c.b16 %v615, %v591
    %v712 = vpack.c.b16 %v616, %v592
    %v713 = vpack.c.b16 %v617, %v593
    %v714 = vpack.c.b16 %v618, %v594
    %vm811 = vcmask 523264
    %v813 = vsel %vm811, %v180, 0
    %815 = vmatpush.bf16.msra.mxu0 0
    %816 = vmatpush.bf16.msra.mxu0 0
    %817 = vmatpush.bf16.msra.mxu0 0
    %818 = vmatpush.bf16.msra.mxu0 0
    %819 = vmatpush.bf16.msra.mxu0 %v691
    %820 = vmatpush.bf16.msra.mxu0 %v667
    %821 = vmatpush.bf16.msra.mxu0 %v643
    %822 = vmatpush.bf16.msra.mxu0 %v619
    %823 = vmatmul.bf16.gmra.mxu0 %v813
    %v824 = vpop.f32.mrf.mxu0
    %v825 = vadd.f32 %v283, %v824
    %v826 = vpop.f32.mrf.mxu0
    %v827 = vadd.f32 %v283, %v826
    %828 = vdwg.mxu0
    %829 = vmatpush.bf16.msra.mxu0 0
    %830 = vmatpush.bf16.msra.mxu0 0
    %831 = vmatpush.bf16.msra.mxu0 0
    %832 = vmatpush.bf16.msra.mxu0 0
    %833 = vmatpush.bf16.msra.mxu0 %v692
    %834 = vmatpush.bf16.msra.mxu0 %v668
    %835 = vmatpush.bf16.msra.mxu0 %v644
    %836 = vmatpush.bf16.msra.mxu0 %v620
    %837 = vmatmul.bf16.gmra.mxu0 %v813
    %v838 = vpop.f32.mrf.mxu0
    %v839 = vadd.f32 %v284, %v838
    %v840 = vpop.f32.mrf.mxu0
    %v841 = vadd.f32 %v284, %v840
    %842 = vdwg.mxu0
    %843 = vmatpush.bf16.msra.mxu0 0
    %844 = vmatpush.bf16.msra.mxu0 0
    %845 = vmatpush.bf16.msra.mxu0 0
    %846 = vmatpush.bf16.msra.mxu0 0
    %847 = vmatpush.bf16.msra.mxu0 %v693
    %848 = vmatpush.bf16.msra.mxu0 %v669
    %849 = vmatpush.bf16.msra.mxu0 %v645
    %850 = vmatpush.bf16.msra.mxu0 %v621
    %851 = vmatmul.bf16.gmra.mxu0 %v813
    %v852 = vpop.f32.mrf.mxu0
    %v853 = vadd.f32 %v285, %v852
    %v854 = vpop.f32.mrf.mxu0
    %v855 = vadd.f32 %v285, %v854
    %856 = vdwg.mxu0
    %857 = vmatpush.bf16.msra.mxu0 0
    %858 = vmatpush.bf16.msra.mxu0 0
    %859 = vmatpush.bf16.msra.mxu0 0
    %860 = vmatpush.bf16.msra.mxu0 0
    %861 = vmatpush.bf16.msra.mxu0 %v694
    %862 = vmatpush.bf16.msra.mxu0 %v670
    %863 = vmatpush.bf16.msra.mxu0 %v646
    %864 = vmatpush.bf16.msra.mxu0 %v622
    %865 = vmatmul.bf16.gmra.mxu0 %v813
    %v866 = vpop.f32.mrf.mxu0
    %v867 = vadd.f32 %v286, %v866
    %v868 = vpop.f32.mrf.mxu0
    %v869 = vadd.f32 %v286, %v868
    %870 = vdwg.mxu0
    %871 = vmatpush.bf16.msra.mxu0 0
    %872 = vmatpush.bf16.msra.mxu0 0
    %873 = vmatpush.bf16.msra.mxu0 0
    %874 = vmatpush.bf16.msra.mxu0 0
    %875 = vmatpush.bf16.msra.mxu0 %v695
    %876 = vmatpush.bf16.msra.mxu0 %v671
    %877 = vmatpush.bf16.msra.mxu0 %v647
    %878 = vmatpush.bf16.msra.mxu0 %v623
    %879 = vmatmul.bf16.gmra.mxu0 %v813
    %v880 = vpop.f32.mrf.mxu0
    %v881 = vadd.f32 %v287, %v880
    %v882 = vpop.f32.mrf.mxu0
    %v883 = vadd.f32 %v287, %v882
    %884 = vdwg.mxu0
    %885 = vmatpush.bf16.msra.mxu0 0
    %886 = vmatpush.bf16.msra.mxu0 0
    %887 = vmatpush.bf16.msra.mxu0 0
    %888 = vmatpush.bf16.msra.mxu0 0
    %889 = vmatpush.bf16.msra.mxu0 %v696
    %890 = vmatpush.bf16.msra.mxu0 %v672
    %891 = vmatpush.bf16.msra.mxu0 %v648
    %892 = vmatpush.bf16.msra.mxu0 %v624
    %893 = vmatmul.bf16.gmra.mxu0 %v813
    %v894 = vpop.f32.mrf.mxu0
    %v895 = vadd.f32 %v288, %v894
    %v896 = vpop.f32.mrf.mxu0
    %v897 = vadd.f32 %v288, %v896
    %898 = vdwg.mxu0
    %899 = vmatpush.bf16.msra.mxu0 0
    %900 = vmatpush.bf16.msra.mxu0 0
    %901 = vmatpush.bf16.msra.mxu0 0
    %902 = vmatpush.bf16.msra.mxu0 0
    %903 = vmatpush.bf16.msra.mxu0 %v697
    %904 = vmatpush.bf16.msra.mxu0 %v673
    %905 = vmatpush.bf16.msra.mxu0 %v649
    %906 = vmatpush.bf16.msra.mxu0 %v625
    %907 = vmatmul.bf16.gmra.mxu0 %v813
    %v908 = vpop.f32.mrf.mxu0
    %v909 = vadd.f32 %v289, %v908
    %v910 = vpop.f32.mrf.mxu0
    %v911 = vadd.f32 %v289, %v910
    %912 = vdwg.mxu0
    %913 = vmatpush.bf16.msra.mxu0 0
    %914 = vmatpush.bf16.msra.mxu0 0
    %915 = vmatpush.bf16.msra.mxu0 0
    %916 = vmatpush.bf16.msra.mxu0 0
    %917 = vmatpush.bf16.msra.mxu0 %v698
    %918 = vmatpush.bf16.msra.mxu0 %v674
    %919 = vmatpush.bf16.msra.mxu0 %v650
    %920 = vmatpush.bf16.msra.mxu0 %v626
    %921 = vmatmul.bf16.gmra.mxu0 %v813
    %v922 = vpop.f32.mrf.mxu0
    %v923 = vadd.f32 %v290, %v922
    %v924 = vpop.f32.mrf.mxu0
    %v925 = vadd.f32 %v290, %v924
    %926 = vdwg.mxu0
    %927 = vmatpush.bf16.msra.mxu0 0
    %928 = vmatpush.bf16.msra.mxu0 0
    %929 = vmatpush.bf16.msra.mxu0 0
    %930 = vmatpush.bf16.msra.mxu0 0
    %931 = vmatpush.bf16.msra.mxu0 %v699
    %932 = vmatpush.bf16.msra.mxu0 %v675
    %933 = vmatpush.bf16.msra.mxu0 %v651
    %934 = vmatpush.bf16.msra.mxu0 %v627
    %935 = vmatmul.bf16.gmra.mxu0 %v813
    %v936 = vpop.f32.mrf.mxu0
    %v937 = vadd.f32 %v291, %v936
    %v938 = vpop.f32.mrf.mxu0
    %v939 = vadd.f32 %v291, %v938
    %940 = vdwg.mxu0
    %941 = vmatpush.bf16.msra.mxu0 0
    %942 = vmatpush.bf16.msra.mxu0 0
    %943 = vmatpush.bf16.msra.mxu0 0
    %944 = vmatpush.bf16.msra.mxu0 0
    %945 = vmatpush.bf16.msra.mxu0 %v700
    %946 = vmatpush.bf16.msra.mxu0 %v676
    %947 = vmatpush.bf16.msra.mxu0 %v652
    %948 = vmatpush.bf16.msra.mxu0 %v628
    %949 = vmatmul.bf16.gmra.mxu0 %v813
    %v950 = vpop.f32.mrf.mxu0
    %v951 = vadd.f32 %v292, %v950
    %v952 = vpop.f32.mrf.mxu0
    %v953 = vadd.f32 %v292, %v952
    %954 = vdwg.mxu0
    %955 = vmatpush.bf16.msra.mxu0 0
    %956 = vmatpush.bf16.msra.mxu0 0
    %957 = vmatpush.bf16.msra.mxu0 0
    %958 = vmatpush.bf16.msra.mxu0 0
    %959 = vmatpush.bf16.msra.mxu0 %v701
    %960 = vmatpush.bf16.msra.mxu0 %v677
    %961 = vmatpush.bf16.msra.mxu0 %v653
    %962 = vmatpush.bf16.msra.mxu0 %v629
    %963 = vmatmul.bf16.gmra.mxu0 %v813
    %v964 = vpop.f32.mrf.mxu0
    %v965 = vadd.f32 %v293, %v964
    %v966 = vpop.f32.mrf.mxu0
    %v967 = vadd.f32 %v293, %v966
    %968 = vdwg.mxu0
    %969 = vmatpush.bf16.msra.mxu0 0
    %970 = vmatpush.bf16.msra.mxu0 0
    %971 = vmatpush.bf16.msra.mxu0 0
    %972 = vmatpush.bf16.msra.mxu0 0
    %973 = vmatpush.bf16.msra.mxu0 %v702
    %974 = vmatpush.bf16.msra.mxu0 %v678
    %975 = vmatpush.bf16.msra.mxu0 %v654
    %976 = vmatpush.bf16.msra.mxu0 %v630
    %977 = vmatmul.bf16.gmra.mxu0 %v813
    %v978 = vpop.f32.mrf.mxu0
    %v979 = vadd.f32 %v294, %v978
    %v980 = vpop.f32.mrf.mxu0
    %v981 = vadd.f32 %v294, %v980
    %982 = vdwg.mxu0
    %983 = vmatpush.bf16.msra.mxu0 0
    %984 = vmatpush.bf16.msra.mxu0 0
    %985 = vmatpush.bf16.msra.mxu0 0
    %986 = vmatpush.bf16.msra.mxu0 0
    %987 = vmatpush.bf16.msra.mxu0 %v703
    %988 = vmatpush.bf16.msra.mxu0 %v679
    %989 = vmatpush.bf16.msra.mxu0 %v655
    %990 = vmatpush.bf16.msra.mxu0 %v631
    %991 = vmatmul.bf16.gmra.mxu0 %v813
    %v992 = vpop.f32.mrf.mxu0
    %v993 = vadd.f32 %v295, %v992
    %v994 = vpop.f32.mrf.mxu0
    %v995 = vadd.f32 %v295, %v994
    %996 = vdwg.mxu0
    %997 = vmatpush.bf16.msra.mxu0 0
    %998 = vmatpush.bf16.msra.mxu0 0
    %999 = vmatpush.bf16.msra.mxu0 0
    %1000 = vmatpush.bf16.msra.mxu0 0
    %1001 = vmatpush.bf16.msra.mxu0 %v704
    %1002 = vmatpush.bf16.msra.mxu0 %v680
    %1003 = vmatpush.bf16.msra.mxu0 %v656
    %1004 = vmatpush.bf16.msra.mxu0 %v632
    %1005 = vmatmul.bf16.gmra.mxu0 %v813
    %v1006 = vpop.f32.mrf.mxu0
    %v1007 = vadd.f32 %v296, %v1006
    %v1008 = vpop.f32.mrf.mxu0
    %v1009 = vadd.f32 %v296, %v1008
    %1010 = vdwg.mxu0
    %1011 = vmatpush.bf16.msra.mxu0 0
    %1012 = vmatpush.bf16.msra.mxu0 0
    %1013 = vmatpush.bf16.msra.mxu0 0
    %1014 = vmatpush.bf16.msra.mxu0 0
    %1015 = vmatpush.bf16.msra.mxu0 %v705
    %1016 = vmatpush.bf16.msra.mxu0 %v681
    %1017 = vmatpush.bf16.msra.mxu0 %v657
    %1018 = vmatpush.bf16.msra.mxu0 %v633
    %1019 = vmatmul.bf16.gmra.mxu0 %v813
    %v1020 = vpop.f32.mrf.mxu0
    %v1021 = vadd.f32 %v297, %v1020
    %v1022 = vpop.f32.mrf.mxu0
    %v1023 = vadd.f32 %v297, %v1022
    %1024 = vdwg.mxu0
    %1025 = vmatpush.bf16.msra.mxu0 0
    %1026 = vmatpush.bf16.msra.mxu0 0
    %1027 = vmatpush.bf16.msra.mxu0 0
    %1028 = vmatpush.bf16.msra.mxu0 0
    %1029 = vmatpush.bf16.msra.mxu0 %v706
    %1030 = vmatpush.bf16.msra.mxu0 %v682
    %1031 = vmatpush.bf16.msra.mxu0 %v658
    %1032 = vmatpush.bf16.msra.mxu0 %v634
    %1033 = vmatmul.bf16.gmra.mxu0 %v813
    %v1034 = vpop.f32.mrf.mxu0
    %v1035 = vadd.f32 %v298, %v1034
    %v1036 = vpop.f32.mrf.mxu0
    %v1037 = vadd.f32 %v298, %v1036
    %1038 = vdwg.mxu0
    %1039 = vmatpush.bf16.msra.mxu0 0
    %1040 = vmatpush.bf16.msra.mxu0 0
    %1041 = vmatpush.bf16.msra.mxu0 0
    %1042 = vmatpush.bf16.msra.mxu0 0
    %1043 = vmatpush.bf16.msra.mxu0 %v707
    %1044 = vmatpush.bf16.msra.mxu0 %v683
    %1045 = vmatpush.bf16.msra.mxu0 %v659
    %1046 = vmatpush.bf16.msra.mxu0 %v635
    %1047 = vmatmul.bf16.gmra.mxu0 %v813
    %v1048 = vpop.f32.mrf.mxu0
    %v1049 = vadd.f32 %v299, %v1048
    %v1050 = vpop.f32.mrf.mxu0
    %v1051 = vadd.f32 %v299, %v1050
    %1052 = vdwg.mxu0
    %1053 = vmatpush.bf16.msra.mxu0 0
    %1054 = vmatpush.bf16.msra.mxu0 0
    %1055 = vmatpush.bf16.msra.mxu0 0
    %1056 = vmatpush.bf16.msra.mxu0 0
    %1057 = vmatpush.bf16.msra.mxu0 %v708
    %1058 = vmatpush.bf16.msra.mxu0 %v684
    %1059 = vmatpush.bf16.msra.mxu0 %v660
    %1060 = vmatpush.bf16.msra.mxu0 %v636
    %1061 = vmatmul.bf16.gmra.mxu0 %v813
    %v1062 = vpop.f32.mrf.mxu0
    %v1063 = vadd.f32 %v300, %v1062
    %v1064 = vpop.f32.mrf.mxu0
    %v1065 = vadd.f32 %v300, %v1064
    %1066 = vdwg.mxu0
    %1067 = vmatpush.bf16.msra.mxu0 0
    %1068 = vmatpush.bf16.msra.mxu0 0
    %1069 = vmatpush.bf16.msra.mxu0 0
    %1070 = vmatpush.bf16.msra.mxu0 0
    %1071 = vmatpush.bf16.msra.mxu0 %v709
    %1072 = vmatpush.bf16.msra.mxu0 %v685
    %1073 = vmatpush.bf16.msra.mxu0 %v661
    %1074 = vmatpush.bf16.msra.mxu0 %v637
    %1075 = vmatmul.bf16.gmra.mxu0 %v813
    %v1076 = vpop.f32.mrf.mxu0
    %v1077 = vadd.f32 %v301, %v1076
    %v1078 = vpop.f32.mrf.mxu0
    %v1079 = vadd.f32 %v301, %v1078
    %1080 = vdwg.mxu0
    %1081 = vmatpush.bf16.msra.mxu0 0
    %1082 = vmatpush.bf16.msra.mxu0 0
    %1083 = vmatpush.bf16.msra.mxu0 0
    %1084 = vmatpush.bf16.msra.mxu0 0
    %1085 = vmatpush.bf16.msra.mxu0 %v710
    %1086 = vmatpush.bf16.msra.mxu0 %v686
    %1087 = vmatpush.bf16.msra.mxu0 %v662
    %1088 = vmatpush.bf16.msra.mxu0 %v638
    %1089 = vmatmul.bf16.gmra.mxu0 %v813
    %v1090 = vpop.f32.mrf.mxu0
    %v1091 = vadd.f32 %v302, %v1090
    %v1092 = vpop.f32.mrf.mxu0
    %v1093 = vadd.f32 %v302, %v1092
    %1094 = vdwg.mxu0
    %1095 = vmatpush.bf16.msra.mxu0 0
    %1096 = vmatpush.bf16.msra.mxu0 0
    %1097 = vmatpush.bf16.msra.mxu0 0
    %1098 = vmatpush.bf16.msra.mxu0 0
    %1099 = vmatpush.bf16.msra.mxu0 %v711
    %1100 = vmatpush.bf16.msra.mxu0 %v687
    %1101 = vmatpush.bf16.msra.mxu0 %v663
    %1102 = vmatpush.bf16.msra.mxu0 %v639
    %1103 = vmatmul.bf16.gmra.mxu0 %v813
    %v1104 = vpop.f32.mrf.mxu0
    %v1105 = vadd.f32 %v303, %v1104
    %v1106 = vpop.f32.mrf.mxu0
    %v1107 = vadd.f32 %v303, %v1106
    %1108 = vdwg.mxu0
    %1109 = vmatpush.bf16.msra.mxu0 0
    %1110 = vmatpush.bf16.msra.mxu0 0
    %1111 = vmatpush.bf16.msra.mxu0 0
    %1112 = vmatpush.bf16.msra.mxu0 0
    %1113 = vmatpush.bf16.msra.mxu0 %v712
    %1114 = vmatpush.bf16.msra.mxu0 %v688
    %1115 = vmatpush.bf16.msra.mxu0 %v664
    %1116 = vmatpush.bf16.msra.mxu0 %v640
    %1117 = vmatmul.bf16.gmra.mxu0 %v813
    %v1118 = vpop.f32.mrf.mxu0
    %v1119 = vadd.f32 %v304, %v1118
    %v1120 = vpop.f32.mrf.mxu0
    %v1121 = vadd.f32 %v304, %v1120
    %1122 = vdwg.mxu0
    %1123 = vmatpush.bf16.msra.mxu0 0
    %1124 = vmatpush.bf16.msra.mxu0 0
    %1125 = vmatpush.bf16.msra.mxu0 0
    %1126 = vmatpush.bf16.msra.mxu0 0
    %1127 = vmatpush.bf16.msra.mxu0 %v713
    %1128 = vmatpush.bf16.msra.mxu0 %v689
    %1129 = vmatpush.bf16.msra.mxu0 %v665
    %1130 = vmatpush.bf16.msra.mxu0 %v641
    %1131 = vmatmul.bf16.gmra.mxu0 %v813
    %v1132 = vpop.f32.mrf.mxu0
    %v1133 = vadd.f32 %v305, %v1132
    %v1134 = vpop.f32.mrf.mxu0
    %v1135 = vadd.f32 %v305, %v1134
    %1136 = vdwg.mxu0
    %1137 = vmatpush.bf16.msra.mxu0 0
    %1138 = vmatpush.bf16.msra.mxu0 0
    %1139 = vmatpush.bf16.msra.mxu0 0
    %1140 = vmatpush.bf16.msra.mxu0 0
    %1141 = vmatpush.bf16.msra.mxu0 %v714
    %1142 = vmatpush.bf16.msra.mxu0 %v690
    %1143 = vmatpush.bf16.msra.mxu0 %v666
    %1144 = vmatpush.bf16.msra.mxu0 %v642
    %1145 = vmatmul.bf16.gmra.mxu0 %v813
    %v1146 = vpop.f32.mrf.mxu0
    %v1147 = vadd.f32 %v306, %v1146
    %v1148 = vpop.f32.mrf.mxu0
    %v1149 = vadd.f32 %v306, %v1148
    %1150 = vdwg.mxu0
    %v1151 = vsub.f32 0.0, %v825
    %v1152 = vsub.f32 0.0, %v839
    %v1153 = vsub.f32 0.0, %v853
    %v1154 = vsub.f32 0.0, %v867
    %v1155 = vsub.f32 0.0, %v881
    %v1156 = vsub.f32 0.0, %v895
    %v1157 = vsub.f32 0.0, %v909
    %v1158 = vsub.f32 0.0, %v923
    %v1159 = vsub.f32 0.0, %v937
    %v1160 = vsub.f32 0.0, %v951
    %v1161 = vsub.f32 0.0, %v965
    %v1162 = vsub.f32 0.0, %v979
    %v1163 = vsub.f32 0.0, %v993
    %v1164 = vsub.f32 0.0, %v1007
    %v1165 = vsub.f32 0.0, %v1021
    %v1166 = vsub.f32 0.0, %v1035
    %v1167 = vsub.f32 0.0, %v1049
    %v1168 = vsub.f32 0.0, %v1063
    %v1169 = vsub.f32 0.0, %v1077
    %v1170 = vsub.f32 0.0, %v1091
    %v1171 = vsub.f32 0.0, %v1105
    %v1172 = vsub.f32 0.0, %v1119
    %v1173 = vsub.f32 0.0, %v1133
    %v1174 = vsub.f32 0.0, %v1147
    %v1175 = vsub.f32 0.0, %v827
    %v1176 = vsub.f32 0.0, %v841
    %v1177 = vsub.f32 0.0, %v855
    %v1178 = vsub.f32 0.0, %v869
    %v1179 = vsub.f32 0.0, %v883
    %v1180 = vsub.f32 0.0, %v897
    %v1181 = vsub.f32 0.0, %v911
    %v1182 = vsub.f32 0.0, %v925
    %v1183 = vsub.f32 0.0, %v939
    %v1184 = vsub.f32 0.0, %v953
    %v1185 = vsub.f32 0.0, %v967
    %v1186 = vsub.f32 0.0, %v981
    %v1187 = vsub.f32 0.0, %v995
    %v1188 = vsub.f32 0.0, %v1009
    %v1189 = vsub.f32 0.0, %v1023
    %v1190 = vsub.f32 0.0, %v1037
    %v1191 = vsub.f32 0.0, %v1051
    %v1192 = vsub.f32 0.0, %v1065
    %v1193 = vsub.f32 0.0, %v1079
    %v1194 = vsub.f32 0.0, %v1093
    %v1195 = vsub.f32 0.0, %v1107
    %v1196 = vsub.f32 0.0, %v1121
    %v1197 = vsub.f32 0.0, %v1135
    %v1198 = vsub.f32 0.0, %v1149
    %v1199 = vmul.f32 %v1151, 1.442695
    %v1200 = vpow.pop %v1199
    %v1201 = vmul.f32 %v1152, 1.442695
    %v1202 = vpow.pop %v1201
    %v1203 = vmul.f32 %v1153, 1.442695
    %v1204 = vpow.pop %v1203
    %v1205 = vmul.f32 %v1154, 1.442695
    %v1206 = vpow.pop %v1205
    %v1207 = vmul.f32 %v1155, 1.442695
    %v1208 = vpow.pop %v1207
    %v1209 = vmul.f32 %v1156, 1.442695
    %v1210 = vpow.pop %v1209
    %v1211 = vmul.f32 %v1157, 1.442695
    %v1212 = vpow.pop %v1211
    %v1213 = vmul.f32 %v1158, 1.442695
    %v1214 = vpow.pop %v1213
    %v1215 = vmul.f32 %v1159, 1.442695
    %v1216 = vpow.pop %v1215
    %v1217 = vmul.f32 %v1160, 1.442695
    %v1218 = vpow.pop %v1217
    %v1219 = vmul.f32 %v1161, 1.442695
    %v1220 = vpow.pop %v1219
    %v1221 = vmul.f32 %v1162, 1.442695
    %v1222 = vpow.pop %v1221
    %v1223 = vmul.f32 %v1163, 1.442695
    %v1224 = vpow.pop %v1223
    %v1225 = vmul.f32 %v1164, 1.442695
    %v1226 = vpow.pop %v1225
    %v1227 = vmul.f32 %v1165, 1.442695
    %v1228 = vpow.pop %v1227
    %v1229 = vmul.f32 %v1166, 1.442695
    %v1230 = vpow.pop %v1229
    %v1231 = vmul.f32 %v1167, 1.442695
    %v1232 = vpow.pop %v1231
    %v1233 = vmul.f32 %v1168, 1.442695
    %v1234 = vpow.pop %v1233
    %v1235 = vmul.f32 %v1169, 1.442695
    %v1236 = vpow.pop %v1235
    %v1237 = vmul.f32 %v1170, 1.442695
    %v1238 = vpow.pop %v1237
    %v1239 = vmul.f32 %v1171, 1.442695
    %v1240 = vpow.pop %v1239
    %v1241 = vmul.f32 %v1172, 1.442695
    %v1242 = vpow.pop %v1241
    %v1243 = vmul.f32 %v1173, 1.442695
    %v1244 = vpow.pop %v1243
    %v1245 = vmul.f32 %v1174, 1.442695
    %v1246 = vpow.pop %v1245
    %v1247 = vmul.f32 %v1175, 1.442695
    %v1248 = vpow.pop %v1247
    %v1249 = vmul.f32 %v1176, 1.442695
    %v1250 = vpow.pop %v1249
    %v1251 = vmul.f32 %v1177, 1.442695
    %v1252 = vpow.pop %v1251
    %v1253 = vmul.f32 %v1178, 1.442695
    %v1254 = vpow.pop %v1253
    %v1255 = vmul.f32 %v1179, 1.442695
    %v1256 = vpow.pop %v1255
    %v1257 = vmul.f32 %v1180, 1.442695
    %v1258 = vpow.pop %v1257
    %v1259 = vmul.f32 %v1181, 1.442695
    %v1260 = vpow.pop %v1259
    %v1261 = vmul.f32 %v1182, 1.442695
    %v1262 = vpow.pop %v1261
    %v1263 = vmul.f32 %v1183, 1.442695
    %v1264 = vpow.pop %v1263
    %v1265 = vmul.f32 %v1184, 1.442695
    %v1266 = vpow.pop %v1265
    %v1267 = vmul.f32 %v1185, 1.442695
    %v1268 = vpow.pop %v1267
    %v1269 = vmul.f32 %v1186, 1.442695
    %v1270 = vpow.pop %v1269
    %v1271 = vmul.f32 %v1187, 1.442695
    %v1272 = vpow.pop %v1271
    %v1273 = vmul.f32 %v1188, 1.442695
    %v1274 = vpow.pop %v1273
    %v1275 = vmul.f32 %v1189, 1.442695
    %v1276 = vpow.pop %v1275
    %v1277 = vmul.f32 %v1190, 1.442695
    %v1278 = vpow.pop %v1277
    %v1279 = vmul.f32 %v1191, 1.442695
    %v1280 = vpow.pop %v1279
    %v1281 = vmul.f32 %v1192, 1.442695
    %v1282 = vpow.pop %v1281
    %v1283 = vmul.f32 %v1193, 1.442695
    %v1284 = vpow.pop %v1283
    %v1285 = vmul.f32 %v1194, 1.442695
    %v1286 = vpow.pop %v1285
    %v1287 = vmul.f32 %v1195, 1.442695
    %v1288 = vpow.pop %v1287
    %v1289 = vmul.f32 %v1196, 1.442695
    %v1290 = vpow.pop %v1289
    %v1291 = vmul.f32 %v1197, 1.442695
    %v1292 = vpow.pop %v1291
    %v1293 = vmul.f32 %v1198, 1.442695
    %v1294 = vpow.pop %v1293
    %v1295 = vadd.f32 %v1200, 1.0
    %v1296 = vadd.f32 %v1202, 1.0
    %v1297 = vadd.f32 %v1204, 1.0
    %v1298 = vadd.f32 %v1206, 1.0
    %v1299 = vadd.f32 %v1208, 1.0
    %v1300 = vadd.f32 %v1210, 1.0
    %v1301 = vadd.f32 %v1212, 1.0
    %v1302 = vadd.f32 %v1214, 1.0
    %v1303 = vadd.f32 %v1216, 1.0
    %v1304 = vadd.f32 %v1218, 1.0
    %v1305 = vadd.f32 %v1220, 1.0
    %v1306 = vadd.f32 %v1222, 1.0
    %v1307 = vadd.f32 %v1224, 1.0
    %v1308 = vadd.f32 %v1226, 1.0
    %v1309 = vadd.f32 %v1228, 1.0
    %v1310 = vadd.f32 %v1230, 1.0
    %v1311 = vadd.f32 %v1232, 1.0
    %v1312 = vadd.f32 %v1234, 1.0
    %v1313 = vadd.f32 %v1236, 1.0
    %v1314 = vadd.f32 %v1238, 1.0
    %v1315 = vadd.f32 %v1240, 1.0
    %v1316 = vadd.f32 %v1242, 1.0
    %v1317 = vadd.f32 %v1244, 1.0
    %v1318 = vadd.f32 %v1246, 1.0
    %v1319 = vadd.f32 %v1248, 1.0
    %v1320 = vadd.f32 %v1250, 1.0
    %v1321 = vadd.f32 %v1252, 1.0
    %v1322 = vadd.f32 %v1254, 1.0
    %v1323 = vadd.f32 %v1256, 1.0
    %v1324 = vadd.f32 %v1258, 1.0
    %v1325 = vadd.f32 %v1260, 1.0
    %v1326 = vadd.f32 %v1262, 1.0
    %v1327 = vadd.f32 %v1264, 1.0
    %v1328 = vadd.f32 %v1266, 1.0
    %v1329 = vadd.f32 %v1268, 1.0
    %v1330 = vadd.f32 %v1270, 1.0
    %v1331 = vadd.f32 %v1272, 1.0
    %v1332 = vadd.f32 %v1274, 1.0
    %v1333 = vadd.f32 %v1276, 1.0
    %v1334 = vadd.f32 %v1278, 1.0
    %v1335 = vadd.f32 %v1280, 1.0
    %v1336 = vadd.f32 %v1282, 1.0
    %v1337 = vadd.f32 %v1284, 1.0
    %v1338 = vadd.f32 %v1286, 1.0
    %v1339 = vadd.f32 %v1288, 1.0
    %v1340 = vadd.f32 %v1290, 1.0
    %v1341 = vadd.f32 %v1292, 1.0
    %v1342 = vadd.f32 %v1294, 1.0
    %v1343 = vrcp.pop %v1295
    %v1344 = vrcp.pop %v1296
    %v1345 = vrcp.pop %v1297
    %v1346 = vrcp.pop %v1298
    %v1347 = vrcp.pop %v1299
    %v1348 = vrcp.pop %v1300
    %v1349 = vrcp.pop %v1301
    %v1350 = vrcp.pop %v1302
    %v1351 = vrcp.pop %v1303
    %v1352 = vrcp.pop %v1304
    %v1353 = vrcp.pop %v1305
    %v1354 = vrcp.pop %v1306
    %v1355 = vrcp.pop %v1307
    %v1356 = vrcp.pop %v1308
    %v1357 = vrcp.pop %v1309
    %v1358 = vrcp.pop %v1310
    %v1359 = vrcp.pop %v1311
    %v1360 = vrcp.pop %v1312
    %v1361 = vrcp.pop %v1313
    %v1362 = vrcp.pop %v1314
    %v1363 = vrcp.pop %v1315
    %v1364 = vrcp.pop %v1316
    %v1365 = vrcp.pop %v1317
    %v1366 = vrcp.pop %v1318
    %v1367 = vrcp.pop %v1319
    %v1368 = vrcp.pop %v1320
    %v1369 = vrcp.pop %v1321
    %v1370 = vrcp.pop %v1322
    %v1371 = vrcp.pop %v1323
    %v1372 = vrcp.pop %v1324
    %v1373 = vrcp.pop %v1325
    %v1374 = vrcp.pop %v1326
    %v1375 = vrcp.pop %v1327
    %v1376 = vrcp.pop %v1328
    %v1377 = vrcp.pop %v1329
    %v1378 = vrcp.pop %v1330
    %v1379 = vrcp.pop %v1331
    %v1380 = vrcp.pop %v1332
    %v1381 = vrcp.pop %v1333
    %v1382 = vrcp.pop %v1334
    %v1383 = vrcp.pop %v1335
    %v1384 = vrcp.pop %v1336
    %v1385 = vrcp.pop %v1337
    %v1386 = vrcp.pop %v1338
    %v1387 = vrcp.pop %v1339
    %v1388 = vrcp.pop %v1340
    %v1389 = vrcp.pop %v1341
    %v1390 = vrcp.pop %v1342
    %1391 = vst [vmem:[#allocation11] sm:$0xff] %v1343
    %1392 = vst [vmem:[#allocation11 + $0x8] sm:$0xff] %v1344
    %1393 = vst [vmem:[#allocation11 + $0x10] sm:$0xff] %v1345
    %1394 = vst [vmem:[#allocation11 + $0x18] sm:$0xff] %v1346
    %1395 = vst [vmem:[#allocation11 + $0x20] sm:$0xff] %v1347
    %1396 = vst [vmem:[#allocation11 + $0x28] sm:$0xff] %v1348
    %1397 = vst [vmem:[#allocation11 + $0x30] sm:$0xff] %v1349
    %1398 = vst [vmem:[#allocation11 + $0x38] sm:$0xff] %v1350
    %1399 = vst [vmem:[#allocation11 + $0x40] sm:$0xff] %v1351
    %1400 = vst [vmem:[#allocation11 + $0x48] sm:$0xff] %v1352
    %1401 = vst [vmem:[#allocation11 + $0x50] sm:$0xff] %v1353
    %1402 = vst [vmem:[#allocation11 + $0x58] sm:$0xff] %v1354
    %1403 = vst [vmem:[#allocation11 + $0x60] sm:$0xff] %v1355
    %1404 = vst [vmem:[#allocation11 + $0x68] sm:$0xff] %v1356
    %1405 = vst [vmem:[#allocation11 + $0x70] sm:$0xff] %v1357
    %1406 = vst [vmem:[#allocation11 + $0x78] sm:$0xff] %v1358
    %1407 = vst [vmem:[#allocation11 + $0x80] sm:$0xff] %v1359
    %1408 = vst [vmem:[#allocation11 + $0x88] sm:$0xff] %v1360
    %1409 = vst [vmem:[#allocation11 + $0x90] sm:$0xff] %v1361
    %1410 = vst [vmem:[#allocation11 + $0x98] sm:$0xff] %v1362
    %1411 = vst [vmem:[#allocation11 + $0xa0] sm:$0xff] %v1363
    %1412 = vst [vmem:[#allocation11 + $0xa8] sm:$0xff] %v1364
    %1413 = vst [vmem:[#allocation11 + $0xb0] sm:$0xff] %v1365
    %1414 = vst [vmem:[#allocation11 + $0xb8] sm:$0xff] %v1366
    %1415 = vst [vmem:[#allocation11 + $0xc0] sm:$0xff] %v1367
    %1416 = vst [vmem:[#allocation11 + $0xc8] sm:$0xff] %v1368
    %1417 = vst [vmem:[#allocation11 + $0xd0] sm:$0xff] %v1369
    %1418 = vst [vmem:[#allocation11 + $0xd8] sm:$0xff] %v1370
    %1419 = vst [vmem:[#allocation11 + $0xe0] sm:$0xff] %v1371
    %1420 = vst [vmem:[#allocation11 + $0xe8] sm:$0xff] %v1372
    %1421 = vst [vmem:[#allocation11 + $0xf0] sm:$0xff] %v1373
    %1422 = vst [vmem:[#allocation11 + $0xf8] sm:$0xff] %v1374
    %1423 = vst [vmem:[#allocation11 + $0x100] sm:$0xff] %v1375
    %1424 = vst [vmem:[#allocation11 + $0x108] sm:$0xff] %v1376
    %1425 = vst [vmem:[#allocation11 + $0x110] sm:$0xff] %v1377
    %1426 = vst [vmem:[#allocation11 + $0x118] sm:$0xff] %v1378
    %1427 = vst [vmem:[#allocation11 + $0x120] sm:$0xff] %v1379
    %1428 = vst [vmem:[#allocation11 + $0x128] sm:$0xff] %v1380
    %1429 = vst [vmem:[#allocation11 + $0x130] sm:$0xff] %v1381
    %1430 = vst [vmem:[#allocation11 + $0x138] sm:$0xff] %v1382
    %1431 = vst [vmem:[#allocation11 + $0x140] sm:$0xff] %v1383
    %1432 = vst [vmem:[#allocation11 + $0x148] sm:$0xff] %v1384
    %1433 = vst [vmem:[#allocation11 + $0x150] sm:$0xff] %v1385
    %1434 = vst [vmem:[#allocation11 + $0x158] sm:$0xff] %v1386
    %1435 = vst [vmem:[#allocation11 + $0x160] sm:$0xff] %v1387
    %1436 = vst [vmem:[#allocation11 + $0x168] sm:$0xff] %v1388
    %1437 = vst [vmem:[#allocation11 + $0x170] sm:$0xff] %v1389
    %1438 = vst [vmem:[#allocation11 + $0x178] sm:$0xff] %v1390
    // Predicated region
    $region50: #{tpu_custom_call.1} parent=1 // pred_check
      _
    $region51: #{tpu_custom_call.1} parent=1 // pred_check_branch
      %1440 = sbr.rel (0) target = $region53
    $region52: #{tpu_custom_call.1} parent=1 // pred_region
      %1442 = vsyncadd [#allocation4], 0
      %s1443 = sshll.u32 [#allocation11], 4
      %s1444 = int_to_ptr.vmem [resolvable:$true] %s1443
      %s1445 = sshll.u32 %s7, 4
      %s1446 = int_to_ptr.hbm [resolvable:$true] %s1445
      %1451 = dma.vmem_to_hbm [thread:$0]  %s1444, 6144, %s1446, [#allocation4], 3072, 3072, 192
    $region53: #{tpu_custom_call.1} parent=1 // pred_fallthru
      _
    // Predicated region
    $region54: #{tpu_custom_call.1} parent=1 // pred_check
      _
    $region55: #{tpu_custom_call.1} parent=1 // pred_check_branch
      %1453 = sbr.rel (0) target = $region57
    $region56: #{tpu_custom_call.1} parent=1 // pred_region
      %1455 = dma.done [#allocation4], 6144
    $region57: #{tpu_custom_call.1} parent=1 // pred_fallthru
      _
    %1456 = vsyncpa [#allocation3], 1
    %1457 = vsyncpa [#allocation6], 1
    %1458 = vsyncpa [#allocation9], 1
    %1459 = vsyncpa [#allocation4], 1

</llo_original>
